<compile_context>
chip_gen: v7x
topology: tpu7x:2x2x1
jax: 0.10.0
libtpu: 0.0.40
codegen_flags: <defaults>
</compile_context>

<pallas_src>
import jax
import jax.numpy as jnp
from jax.experimental import pallas as pl
from jax.experimental.pallas import tpu as pltpu


def _mlp_kernel(x_ref, w1_ref, b1_ref, w2_ref, b2_ref, w3_ref, b3_ref,
                w4_ref, b4_ref, o_ref):
    # x tile arrives as f32 (native HBM dtype); cast to bf16 in-register so the
    # MXU sees bf16 operands without an extra HBM pass in the wrapper.
    x = x_ref[...].astype(jnp.bfloat16)                       # (TB, 217)

    # fc1 + ReLU (bf16 x bf16 -> f32 accumulation on the MXU)
    h = jnp.dot(x, w1_ref[...], preferred_element_type=jnp.float32) + b1_ref[...]
    h = jnp.maximum(h, 0.0)

    # fc2 + ReLU
    h = jnp.dot(h.astype(jnp.bfloat16), w2_ref[...],
                preferred_element_type=jnp.float32) + b2_ref[...]
    h = jnp.maximum(h, 0.0)

    # fc3 + ReLU
    h = jnp.dot(h.astype(jnp.bfloat16), w3_ref[...],
                preferred_element_type=jnp.float32) + b3_ref[...]
    h = jnp.maximum(h, 0.0)                                   # (TB, 10) f32

    # fc4 (10 -> 1) on the MXU, stored as a (TB, 1) tile.
    logits = jnp.dot(h.astype(jnp.bfloat16), w4_ref[...],
                     preferred_element_type=jnp.float32) + b4_ref[...]
    o_ref[...] = jax.nn.sigmoid(logits).astype(o_ref.dtype)   # (TB, 1)


def _choose_tb(B, tb_max):
    """Batch tile: single block for small B, otherwise >= ~4 lane-aligned blocks."""
    if B <= 512:
        return B                              # block dims == full array dims
    tb = -(-B // 4)                           # cdiv(B, 4): aim for >= 4 grid steps
    tb = ((tb + 127) // 128) * 128            # keep rows a multiple of 128
    return min(tb_max, max(512, tb))


def two_layers_net_forward(x, params, *, tb_max=2048):
    """x: [B, 217] f32. params: weights stored [in, out], biases [1, out]."""
    B, F = x.shape

    TB = _choose_tb(B, tb_max)
    grid = (pl.cdiv(B, TB),)

    # Weights are tiny: cast once to bf16 (MXU-native); biases stay f32.
    w1 = params["w1"].astype(jnp.bfloat16)
    w2 = params["w2"].astype(jnp.bfloat16)
    w3 = params["w3"].astype(jnp.bfloat16)
    w4 = params["w4"].astype(jnp.bfloat16)                    # (10, 1)
    b1, b2, b3 = params["b1"], params["b2"], params["b3"]
    b4 = params["b4"].astype(jnp.float32)                     # (1, 1)

    def resident(arr):
        nd = arr.ndim
        return pl.BlockSpec(arr.shape, lambda i, _nd=nd: (0,) * _nd)

    out = pl.pallas_call(
        _mlp_kernel,
        out_shape=jax.ShapeDtypeStruct((B, 1), jnp.float32),
        grid=grid,
        in_specs=[
            pl.BlockSpec((TB, F), lambda i: (i, 0)),          # x: streamed per tile (f32)
            resident(w1), resident(b1),
            resident(w2), resident(b2),
            resident(w3), resident(b3),
            resident(w4), resident(b4),
        ],
        out_specs=pl.BlockSpec((TB, 1), lambda i: (i, 0)),
        compiler_params=pltpu.CompilerParams(
            dimension_semantics=("parallel",)),               # megacore on v7x
    )(x, w1, b1, w2, b2, w3, b3, w4, b4)

    return out


def init_params(key):
    """Deterministic init matching nn.Linear shapes (217->100->50->10->1).

    PyTorch Linear stores weight as [out, in]; here we store the transpose
    ([in, out]) so the kernel computes x @ W directly. Biases kept [1, out]."""
    dims = [(217, 100), (100, 50), (50, 10), (10, 1)]
    params = {}
    for idx, (fan_in, fan_out) in enumerate(dims, start=1):
        key, kw, kb = jax.random.split(key, 3)
        bound = 1.0 / jnp.sqrt(fan_in)
        params[f"w{idx}"] = jax.random.uniform(
            kw, (fan_in, fan_out), jnp.float32, minval=-bound, maxval=bound)
        params[f"b{idx}"] = jax.random.uniform(
            kb, (1, fan_out), jnp.float32, minval=-bound, maxval=bound)
    return params


def reference_forward(x, params):
    h = jnp.maximum(x @ params["w1"] + params["b1"], 0.0)
    h = jnp.maximum(h @ params["w2"] + params["b2"], 0.0)
    h = jnp.maximum(h @ params["w3"] + params["b3"], 0.0)
    return jax.nn.sigmoid(h @ params["w4"] + params["b4"])


if __name__ == "__main__":
    key = jax.random.PRNGKey(0)
    key, kx1, kx2 = jax.random.split(key, 3)
    params = init_params(key)

    # Test 1: small batch (single full block, TB == B).
    B1 = 8
    x1 = jax.random.normal(kx1, (B1, 217), jnp.float32)
    out1 = jax.block_until_ready(two_layers_net_forward(x1, params))
    ref1 = reference_forward(x1, params)
    assert out1.shape == (B1, 1), out1.shape
    # Tolerance is driven by the bf16 cast of x / weights (f32 accumulation),
    # not by the kernel structure.
    assert jnp.allclose(out1, ref1, atol=2e-2, rtol=2e-2), "mismatch (B=8)"

    # Test 2: multi-block grid with a partial, non-128-aligned last block
    # (exercises the clipped output writeback on the final grid step).
    B2 = 1300
    x2 = jax.random.normal(kx2, (B2, 217), jnp.float32)
    out2 = jax.block_until_ready(two_layers_net_forward(x2, params, tb_max=512))
    ref2 = reference_forward(x2, params)
    assert out2.shape == (B2, 1), out2.shape
    assert bool(jnp.all(jnp.isfinite(out2))), "non-finite values in output"
    assert jnp.allclose(out2, ref2, atol=2e-2, rtol=2e-2), "mismatch (B=1300)"

    print("KERNEL_OK")
</pallas_src>

<mosaic_0001>
module attributes {stable_mosaic.version = 11 : i64} {
  func.func @_mlp_kernel(%arg0: i32, %arg1: memref<8x217xf32, #tpu.memory_space<vmem>>, %arg2: memref<217x100xbf16, #tpu.memory_space<vmem>>, %arg3: memref<1x100xf32, #tpu.memory_space<vmem>>, %arg4: memref<100x50xbf16, #tpu.memory_space<vmem>>, %arg5: memref<1x50xf32, #tpu.memory_space<vmem>>, %arg6: memref<50x10xbf16, #tpu.memory_space<vmem>>, %arg7: memref<1x10xf32, #tpu.memory_space<vmem>>, %arg8: memref<10x1xbf16, #tpu.memory_space<vmem>>, %arg9: memref<1x1xf32, #tpu.memory_space<vmem>>, %arg10: memref<8x1xf32, #tpu.memory_space<vmem>>) attributes {dimension_semantics = [#tpu.dimension_semantics<parallel>], iteration_bounds = array<i64: 1>, scalar_prefetch = 0 : i64, scratch_operands = 0 : i64, tpu.core_type = #tpu.core_type<tc>, window_params = [{transform_indices = @transform_0, window_bounds = array<i64: 8, 217>}, {pipeline_mode = #tpu.pipeline_mode<synchronous>, transform_indices = @transform_1, window_bounds = array<i64: 217, 100>}, {pipeline_mode = #tpu.pipeline_mode<synchronous>, transform_indices = @transform_2, window_bounds = array<i64: 1, 100>}, {pipeline_mode = #tpu.pipeline_mode<synchronous>, transform_indices = @transform_3, window_bounds = array<i64: 100, 50>}, {pipeline_mode = #tpu.pipeline_mode<synchronous>, transform_indices = @transform_4, window_bounds = array<i64: 1, 50>}, {pipeline_mode = #tpu.pipeline_mode<synchronous>, transform_indices = @transform_5, window_bounds = array<i64: 50, 10>}, {pipeline_mode = #tpu.pipeline_mode<synchronous>, transform_indices = @transform_6, window_bounds = array<i64: 1, 10>}, {pipeline_mode = #tpu.pipeline_mode<synchronous>, transform_indices = @transform_7, window_bounds = array<i64: 10, 1>}, {pipeline_mode = #tpu.pipeline_mode<synchronous>, transform_indices = @transform_8, window_bounds = array<i64: 1, 1>}, {transform_indices = @transform_9, window_bounds = array<i64: 8, 1>}]} {
    %c0 = arith.constant 0 : index
    %c0_0 = arith.constant 0 : index
    %0 = vector.load %arg1[%c0, %c0_0] : memref<8x217xf32, #tpu.memory_space<vmem>>, vector<8x217xf32>
    %1 = arith.truncf %0 : vector<8x217xf32> to vector<8x217xbf16>
    %c0_1 = arith.constant 0 : index
    %c0_2 = arith.constant 0 : index
    %2 = vector.load %arg2[%c0_1, %c0_2] : memref<217x100xbf16, #tpu.memory_space<vmem>>, vector<217x100xbf16>
    %cst = arith.constant dense<0.000000e+00> : vector<8x100xf32>
    %3 = tpu.matmul %1, %2, %cst {dimension_numbers = #tpu.dot_dimension_numbers<[1], [0], [0], [1], [0, 0, 1, 1], [], []>} : vector<8x217xbf16>, vector<217x100xbf16>, vector<8x100xf32> -> vector<8x100xf32>
    %c0_3 = arith.constant 0 : index
    %c0_4 = arith.constant 0 : index
    %4 = vector.load %arg3[%c0_3, %c0_4] : memref<1x100xf32, #tpu.memory_space<vmem>>, vector<1x100xf32>
    %5 = vector.broadcast %4 : vector<1x100xf32> to vector<8x100xf32>
    %6 = arith.addf %3, %5 : vector<8x100xf32>
    %cst_5 = arith.constant 0.000000e+00 : f32
    %7 = vector.broadcast %cst_5 : f32 to vector<8x100xf32>
    %8 = arith.maximumf %6, %7 : vector<8x100xf32>
    %9 = arith.truncf %8 : vector<8x100xf32> to vector<8x100xbf16>
    %c0_6 = arith.constant 0 : index
    %c0_7 = arith.constant 0 : index
    %10 = vector.load %arg4[%c0_6, %c0_7] : memref<100x50xbf16, #tpu.memory_space<vmem>>, vector<100x50xbf16>
    %cst_8 = arith.constant dense<0.000000e+00> : vector<8x50xf32>
    %11 = tpu.matmul %9, %10, %cst_8 {dimension_numbers = #tpu.dot_dimension_numbers<[1], [0], [0], [1], [0, 0, 1, 1], [], []>} : vector<8x100xbf16>, vector<100x50xbf16>, vector<8x50xf32> -> vector<8x50xf32>
    %c0_9 = arith.constant 0 : index
    %c0_10 = arith.constant 0 : index
    %12 = vector.load %arg5[%c0_9, %c0_10] : memref<1x50xf32, #tpu.memory_space<vmem>>, vector<1x50xf32>
    %13 = vector.broadcast %12 : vector<1x50xf32> to vector<8x50xf32>
    %14 = arith.addf %11, %13 : vector<8x50xf32>
    %cst_11 = arith.constant 0.000000e+00 : f32
    %15 = vector.broadcast %cst_11 : f32 to vector<8x50xf32>
    %16 = arith.maximumf %14, %15 : vector<8x50xf32>
    %17 = arith.truncf %16 : vector<8x50xf32> to vector<8x50xbf16>
    %c0_12 = arith.constant 0 : index
    %c0_13 = arith.constant 0 : index
    %18 = vector.load %arg6[%c0_12, %c0_13] : memref<50x10xbf16, #tpu.memory_space<vmem>>, vector<50x10xbf16>
    %cst_14 = arith.constant dense<0.000000e+00> : vector<8x10xf32>
    %19 = tpu.matmul %17, %18, %cst_14 {dimension_numbers = #tpu.dot_dimension_numbers<[1], [0], [0], [1], [0, 0, 1, 1], [], []>} : vector<8x50xbf16>, vector<50x10xbf16>, vector<8x10xf32> -> vector<8x10xf32>
    %c0_15 = arith.constant 0 : index
    %c0_16 = arith.constant 0 : index
    %20 = vector.load %arg7[%c0_15, %c0_16] : memref<1x10xf32, #tpu.memory_space<vmem>>, vector<1x10xf32>
    %21 = vector.broadcast %20 : vector<1x10xf32> to vector<8x10xf32>
    %22 = arith.addf %19, %21 : vector<8x10xf32>
    %cst_17 = arith.constant 0.000000e+00 : f32
    %23 = vector.broadcast %cst_17 : f32 to vector<8x10xf32>
    %24 = arith.maximumf %22, %23 : vector<8x10xf32>
    %25 = arith.truncf %24 : vector<8x10xf32> to vector<8x10xbf16>
    %c0_18 = arith.constant 0 : index
    %c0_19 = arith.constant 0 : index
    %26 = vector.load %arg8[%c0_18, %c0_19] : memref<10x1xbf16, #tpu.memory_space<vmem>>, vector<10x1xbf16>
    %cst_20 = arith.constant dense<0.000000e+00> : vector<8x1xf32>
    %27 = tpu.matmul %25, %26, %cst_20 {dimension_numbers = #tpu.dot_dimension_numbers<[1], [0], [0], [1], [0, 0, 1, 1], [], []>} : vector<8x10xbf16>, vector<10x1xbf16>, vector<8x1xf32> -> vector<8x1xf32>
    %c0_21 = arith.constant 0 : index
    %c0_22 = arith.constant 0 : index
    %28 = vector.load %arg9[%c0_21, %c0_22] : memref<1x1xf32, #tpu.memory_space<vmem>>, vector<1x1xf32>
    %29 = vector.broadcast %28 : vector<1x1xf32> to vector<8x1xf32>
    %30 = arith.addf %27, %29 : vector<8x1xf32>
    %31 = arith.negf %30 : vector<8x1xf32>
    %32 = math.exp %31 : vector<8x1xf32>
    %cst_23 = arith.constant 1.000000e+00 : f32
    %33 = vector.broadcast %cst_23 : f32 to vector<8x1xf32>
    %34 = arith.addf %33, %32 : vector<8x1xf32>
    %35 = arith.divf %33, %34 : vector<8x1xf32>
    %c0_24 = arith.constant 0 : index
    %c0_25 = arith.constant 0 : index
    %36 = vector.load %arg10[%c0_24, %c0_25] : memref<8x1xf32, #tpu.memory_space<vmem>>, vector<8x1xf32>
    tpu.vector_store %arg10[%c0_24, %c0_25], %35 {strides = array<i32>} : memref<8x1xf32, #tpu.memory_space<vmem>>, vector<8x1xf32>,
    return
  }
  func.func @transform_0(%arg0: i32) -> (i32, i32) {
    %c0_i32 = arith.constant 0 : i32
    %c0_i32_0 = arith.constant 0 : i32
    return %arg0, %c0_i32 : i32, i32
  }
  func.func @transform_1(%arg0: i32) -> (i32, i32) {
    %c0_i32 = arith.constant 0 : i32
    %c0_i32_0 = arith.constant 0 : i32
    %c0_i32_1 = arith.constant 0 : i32
    return %c0_i32, %c0_i32_0 : i32, i32
  }
  func.func @transform_2(%arg0: i32) -> (i32, i32) {
    %c0_i32 = arith.constant 0 : i32
    %c0_i32_0 = arith.constant 0 : i32
    %c0_i32_1 = arith.constant 0 : i32
    return %c0_i32, %c0_i32_0 : i32, i32
  }
  func.func @transform_3(%arg0: i32) -> (i32, i32) {
    %c0_i32 = arith.constant 0 : i32
    %c0_i32_0 = arith.constant 0 : i32
    %c0_i32_1 = arith.constant 0 : i32
    return %c0_i32, %c0_i32_0 : i32, i32
  }
  func.func @transform_4(%arg0: i32) -> (i32, i32) {
    %c0_i32 = arith.constant 0 : i32
    %c0_i32_0 = arith.constant 0 : i32
    %c0_i32_1 = arith.constant 0 : i32
    return %c0_i32, %c0_i32_0 : i32, i32
  }
  func.func @transform_5(%arg0: i32) -> (i32, i32) {
    %c0_i32 = arith.constant 0 : i32
    %c0_i32_0 = arith.constant 0 : i32
    %c0_i32_1 = arith.constant 0 : i32
    return %c0_i32, %c0_i32_0 : i32, i32
  }
  func.func @transform_6(%arg0: i32) -> (i32, i32) {
    %c0_i32 = arith.constant 0 : i32
    %c0_i32_0 = arith.constant 0 : i32
    %c0_i32_1 = arith.constant 0 : i32
    return %c0_i32, %c0_i32_0 : i32, i32
  }
  func.func @transform_7(%arg0: i32) -> (i32, i32) {
    %c0_i32 = arith.constant 0 : i32
    %c0_i32_0 = arith.constant 0 : i32
    %c0_i32_1 = arith.constant 0 : i32
    return %c0_i32, %c0_i32_0 : i32, i32
  }
  func.func @transform_8(%arg0: i32) -> (i32, i32) {
    %c0_i32 = arith.constant 0 : i32
    %c0_i32_0 = arith.constant 0 : i32
    %c0_i32_1 = arith.constant 0 : i32
    return %c0_i32, %c0_i32_0 : i32, i32
  }
  func.func @transform_9(%arg0: i32) -> (i32, i32) {
    %c0_i32 = arith.constant 0 : i32
    %c0_i32_0 = arith.constant 0 : i32
    return %arg0, %c0_i32 : i32, i32
  }
}

</mosaic_0001>

<llo_original>
// kernel: tpu_custom_call.1
$region0: #{tpu_custom_call.1}
  #allocation0 [shape = 'u32[]', space=smem, size = 0x4, offset = 0x4, fixed_abs, tag = 'smem constant byte address 0x4 - core index']
  #allocation1 [shape = 'u32[144,128]{1,0:T(1,128)}', space=vmem, size = 0x12000, scoped, tag = 'internal scratch']
  #allocation2 [shape = 'f32[1,1]{1,0:T(1,128)S(1)}', space=vmem, size = 0x200, scoped, tag = 'scoped memory for tpu_custom_call.1']
  %s0 = inlined_call_operand.vmem [shape: f32[8,217], index: 0, kind: input, shape index: {}]
  %s1 = inlined_call_operand.vmem [shape: bf16[217,100], index: 1, kind: input, shape index: {}]
  %s2 = inlined_call_operand.vmem [shape: f32[1,100], index: 2, kind: input, shape index: {}]
  %s3 = inlined_call_operand.vmem [shape: bf16[100,50], index: 3, kind: input, shape index: {}]
  %s4 = inlined_call_operand.vmem [shape: f32[1,50], index: 4, kind: input, shape index: {}]
  %s5 = inlined_call_operand.vmem [shape: bf16[50,10], index: 5, kind: input, shape index: {}]
  %s6 = inlined_call_operand.vmem [shape: f32[1,10], index: 6, kind: input, shape index: {}]
  %s7 = inlined_call_operand.vmem [shape: bf16[10,1], index: 7, kind: input, shape index: {}]
  %s8 = inlined_call_operand.<no memory space> [shape: f32[1,1], index: 8, kind: input, shape index: {}]
  %s9 = inlined_call_operand.vmem [shape: f32[8,1], index: 9, kind: output, shape index: {}]
  %s10 = sld [smem:[#allocation0]]
  $region46: #{tpu_custom_call.1} parent=0
    _
  %s12 = ssub.s32 1, %s10
  %s13 = scalar_select 0, %s12, %s10
  %v14 = vstv %s8
  %15 = vst [vmem:[#allocation2] sm:$0x1] %v14
  // Predicated region
  $region2: #{tpu_custom_call.1} parent=0 // pred_check
    _
  $region3: #{tpu_custom_call.1} parent=0 // pred_check_branch
    %17 = sbr.rel (0) target = $region5
  $region4: #{tpu_custom_call.1} parent=0 // pred_region
    _
  $region5: #{tpu_custom_call.1} parent=0 // pred_fallthru
    _
  // Predicated region
  $region6: #{tpu_custom_call.1} parent=0 // pred_check
    _
  $region7: #{tpu_custom_call.1} parent=0 // pred_check_branch
    %19 = sbr.rel (0) target = $region9
  $region8: #{tpu_custom_call.1} parent=0 // pred_region
    _
  $region9: #{tpu_custom_call.1} parent=0 // pred_fallthru
    _
  // Predicated region
  $region10: #{tpu_custom_call.1} parent=0 // pred_check
    _
  $region11: #{tpu_custom_call.1} parent=0 // pred_check_branch
    %21 = sbr.rel (0) target = $region13
  $region12: #{tpu_custom_call.1} parent=0 // pred_region
    _
  $region13: #{tpu_custom_call.1} parent=0 // pred_fallthru
    _
  // Predicated region
  $region14: #{tpu_custom_call.1} parent=0 // pred_check
    _
  $region15: #{tpu_custom_call.1} parent=0 // pred_check_branch
    %23 = sbr.rel (0) target = $region17
  $region16: #{tpu_custom_call.1} parent=0 // pred_region
    _
  $region17: #{tpu_custom_call.1} parent=0 // pred_fallthru
    _
  // Predicated region
  $region18: #{tpu_custom_call.1} parent=0 // pred_check
    _
  $region19: #{tpu_custom_call.1} parent=0 // pred_check_branch
    %25 = sbr.rel (0) target = $region21
  $region20: #{tpu_custom_call.1} parent=0 // pred_region
    _
  $region21: #{tpu_custom_call.1} parent=0 // pred_fallthru
    _
  // Predicated region
  $region22: #{tpu_custom_call.1} parent=0 // pred_check
    _
  $region23: #{tpu_custom_call.1} parent=0 // pred_check_branch
    %27 = sbr.rel (0) target = $region25
  $region24: #{tpu_custom_call.1} parent=0 // pred_region
    _
  $region25: #{tpu_custom_call.1} parent=0 // pred_fallthru
    _
  // Predicated region
  $region26: #{tpu_custom_call.1} parent=0 // pred_check
    _
  $region27: #{tpu_custom_call.1} parent=0 // pred_check_branch
    %29 = sbr.rel (0) target = $region29
  $region28: #{tpu_custom_call.1} parent=0 // pred_region
    _
  $region29: #{tpu_custom_call.1} parent=0 // pred_fallthru
    _
  // Predicated region
  $region30: #{tpu_custom_call.1} parent=0 // pred_check
    _
  $region31: #{tpu_custom_call.1} parent=0 // pred_check_branch
    %31 = sbr.rel (0) target = $region33
  $region32: #{tpu_custom_call.1} parent=0 // pred_region
    _
  $region33: #{tpu_custom_call.1} parent=0 // pred_fallthru
    _
  // Predicated region
  $region34: #{tpu_custom_call.1} parent=0 // pred_check
    _
  $region35: #{tpu_custom_call.1} parent=0 // pred_check_branch
    %33 = sbr.rel (0) target = $region37
  $region36: #{tpu_custom_call.1} parent=0 // pred_region
    _
  $region37: #{tpu_custom_call.1} parent=0 // pred_fallthru
    _
  %v35 = vld [vmem:[%s0] sm:$0xff]
  %v36 = vld [vmem:[%s0 + $0x8] sm:$0xff]
  %v37 = vpack.c.bf16 %v35, %v35
  %v38 = vpack.c.bf16 %v36, %v36
  %v39 = vld [vmem:[%s1] sm:$0xf]
  %v40 = vld [vmem:[%s1 + $0x4] sm:$0xf]
  %v41 = vld [vmem:[%s1 + $0x8] sm:$0xf]
  %v42 = vld [vmem:[%s1 + $0xc] sm:$0xf]
  %v43 = vld [vmem:[%s1 + $0x10] sm:$0xf]
  %v44 = vld [vmem:[%s1 + $0x14] sm:$0xf]
  %v45 = vld [vmem:[%s1 + $0x18] sm:$0xf]
  %v46 = vld [vmem:[%s1 + $0x1c] sm:$0xf]
  %v47 = vld [vmem:[%s1 + $0x20] sm:$0xf]
  %v48 = vld [vmem:[%s1 + $0x24] sm:$0xf]
  %v49 = vld [vmem:[%s1 + $0x28] sm:$0xf]
  %v50 = vld [vmem:[%s1 + $0x2c] sm:$0xf]
  %v51 = vld [vmem:[%s1 + $0x30] sm:$0xf]
  %v52 = vld [vmem:[%s1 + $0x34] sm:$0xf]
  %v53 = vld [vmem:[%s1 + $0x38] sm:$0xf]
  %v54 = vld [vmem:[%s1 + $0x3c] sm:$0xf]
  %v55 = vld [vmem:[%s1 + $0x40] sm:$0xf]
  %v56 = vld [vmem:[%s1 + $0x44] sm:$0xf]
  %v57 = vld [vmem:[%s1 + $0x48] sm:$0xf]
  %v58 = vld [vmem:[%s1 + $0x4c] sm:$0xf]
  %v59 = vld [vmem:[%s1 + $0x50] sm:$0xf]
  %v60 = vld [vmem:[%s1 + $0x54] sm:$0xf]
  %v61 = vld [vmem:[%s1 + $0x58] sm:$0xf]
  %v62 = vld [vmem:[%s1 + $0x5c] sm:$0xf]
  %v63 = vld [vmem:[%s1 + $0x60] sm:$0xf]
  %v64 = vld [vmem:[%s1 + $0x64] sm:$0xf]
  %v65 = vld [vmem:[%s1 + $0x68] sm:$0xf]
  %v66 = vld [vmem:[%s1 + $0x6c] sm:$0x1]
  %v67 = vld [vmem:[%s2] sm:$0x1]
  %v69 = vlaneseq
  %v70 = vshrl.u32 %v69, 7
  %v71 = vsub.s32 0, %v70
  %v72 = vrot.slane %v67, %v71
  %v102 = vunpack.c.l.b16 %v39
  %v103 = vunpack.c.l.b16 %v40
  %v104 = vunpack.c.l.b16 %v41
  %v105 = vunpack.c.l.b16 %v42
  %v106 = vunpack.c.l.b16 %v43
  %v107 = vunpack.c.l.b16 %v44
  %v108 = vunpack.c.l.b16 %v45
  %v109 = vunpack.c.l.b16 %v46
  %v110 = vunpack.c.l.b16 %v47
  %v111 = vunpack.c.l.b16 %v48
  %v112 = vunpack.c.l.b16 %v49
  %v113 = vunpack.c.l.b16 %v50
  %v114 = vunpack.c.l.b16 %v51
  %v115 = vunpack.c.l.b16 %v52
  %v116 = vunpack.c.l.b16 %v53
  %v117 = vunpack.c.l.b16 %v54
  %v118 = vunpack.c.l.b16 %v55
  %v119 = vunpack.c.l.b16 %v56
  %v120 = vunpack.c.l.b16 %v57
  %v121 = vunpack.c.l.b16 %v58
  %v122 = vunpack.c.l.b16 %v59
  %v123 = vunpack.c.l.b16 %v60
  %v124 = vunpack.c.l.b16 %v61
  %v125 = vunpack.c.l.b16 %v62
  %v126 = vunpack.c.l.b16 %v63
  %v127 = vunpack.c.l.b16 %v64
  %v128 = vunpack.c.l.b16 %v65
  %v129 = vunpack.c.l.b16 %v66
  %v130 = vpack.c.b16 %v103, %v102
  %v131 = vpack.c.b16 %v105, %v104
  %v132 = vpack.c.b16 %v107, %v106
  %v133 = vpack.c.b16 %v109, %v108
  %v134 = vpack.c.b16 %v111, %v110
  %v135 = vpack.c.b16 %v113, %v112
  %v136 = vpack.c.b16 %v115, %v114
  %v137 = vpack.c.b16 %v117, %v116
  %v138 = vpack.c.b16 %v119, %v118
  %v139 = vpack.c.b16 %v121, %v120
  %v140 = vpack.c.b16 %v123, %v122
  %v141 = vpack.c.b16 %v125, %v124
  %v142 = vpack.c.b16 %v127, %v126
  %v143 = vpack.c.b16 %v129, %v128
  %vm157 = vcmask 728064
  %v159 = vsel %vm157, %v38, 0
  %vm161 = vcmask 1043456
  %vm162 = vcmask 1044480
  %v163 = vsel %vm161, 4294967295, 65535
  %v164 = vsel %vm162, %v163, 0
  %v166 = vand.u32 %v143, %v164
  %168 = vmatprep.subr.bf16.mxu0 0
  %169 = vmatpush1.bf16.msra.mxu0 %v130
  %170 = vmatprep.subr.bf16.mxu0 0
  %171 = vmatpush1.bf16.msra.mxu0 %v131
  %172 = vmatprep.subr.bf16.mxu0 0
  %173 = vmatpush1.bf16.msra.mxu0 %v132
  %174 = vmatprep.subr.bf16.mxu0 0
  %175 = vmatpush1.bf16.msra.mxu0 %v133
  %176 = vmatprep.subr.bf16.mxu0 0
  %177 = vmatpush1.bf16.msra.mxu0 %v134
  %178 = vmatprep.subr.bf16.mxu0 0
  %179 = vmatpush1.bf16.msra.mxu0 %v135
  %180 = vmatprep.subr.bf16.mxu0 0
  %181 = vmatpush1.bf16.msra.mxu0 %v136
  %182 = vmatprep.subr.bf16.mxu0 0
  %183 = vmatpush1.bf16.msra.mxu0 %v137
  %184 = vmatprep.subr.bf16.mxu0 0
  %185 = vmatpush1.bf16.msra.mxu0 %v138
  %186 = vmatprep.subr.bf16.mxu0 0
  %187 = vmatpush1.bf16.msra.mxu0 %v139
  %188 = vmatprep.subr.bf16.mxu0 0
  %189 = vmatpush1.bf16.msra.mxu0 %v140
  %190 = vmatprep.subr.bf16.mxu0 0
  %191 = vmatpush1.bf16.msra.mxu0 %v141
  %192 = vmatprep.subr.bf16.mxu0 0
  %193 = vmatpush1.bf16.msra.mxu0 %v142
  %194 = vmatprep.subr.bf16.mxu0 0
  %195 = vmatpush1.bf16.msra.mxu0 %v166
  %196 = vmatprep.subr.bf16.mxu0 0
  %197 = vmatpush1.bf16.msra.mxu0 0
  %198 = vmatprep.subr.bf16.mxu0 0
  %199 = vmatpush1.bf16.msra.mxu0 0
  %200 = vmatprep.mubr.bf16.mxu0 %v159
  %201 = vmatmul.mubr.bf16.gmra.mrb[0].mxu0 %v37
  %v202 = vpop.f32.mrb[0].mxu0
  %v203 = vadd.f32 %v72, %v202
  %v204 = vpop.f32.mrb[0].mxu0
  %v205 = vpop.f32.mrb[0].mxu0
  %v206 = vpop.f32.mrb[0].mxu0
  %207 = vdwg.mxu0
  %v208 = vmax.f32 %v203, 0.0
  %v209 = vpack.c.bf16 %v208, %v208
  %v210 = vld [vmem:[%s3] sm:$0xf]
  %v211 = vld [vmem:[%s3 + $0x4] sm:$0xf]
  %v212 = vld [vmem:[%s3 + $0x8] sm:$0xf]
  %v213 = vld [vmem:[%s3 + $0xc] sm:$0xf]
  %v214 = vld [vmem:[%s3 + $0x10] sm:$0xf]
  %v215 = vld [vmem:[%s3 + $0x14] sm:$0xf]
  %v216 = vld [vmem:[%s3 + $0x18] sm:$0xf]
  %v217 = vld [vmem:[%s3 + $0x1c] sm:$0xf]
  %v218 = vld [vmem:[%s3 + $0x20] sm:$0xf]
  %v219 = vld [vmem:[%s3 + $0x24] sm:$0xf]
  %v220 = vld [vmem:[%s3 + $0x28] sm:$0xf]
  %v221 = vld [vmem:[%s3 + $0x2c] sm:$0xf]
  %v222 = vld [vmem:[%s3 + $0x30] sm:$0x3]
  %v223 = vld [vmem:[%s4] sm:$0x1]
  %v225 = vlaneseq
  %v226 = vshrl.u32 %v225, 7
  %v227 = vsub.s32 0, %v226
  %v228 = vrot.slane %v223, %v227
  %v243 = vunpack.c.l.b16 %v210
  %v244 = vunpack.c.l.b16 %v211
  %v245 = vunpack.c.l.b16 %v212
  %v246 = vunpack.c.l.b16 %v213
  %v247 = vunpack.c.l.b16 %v214
  %v248 = vunpack.c.l.b16 %v215
  %v249 = vunpack.c.l.b16 %v216
  %v250 = vunpack.c.l.b16 %v217
  %v251 = vunpack.c.l.b16 %v218
  %v252 = vunpack.c.l.b16 %v219
  %v253 = vunpack.c.l.b16 %v220
  %v254 = vunpack.c.l.b16 %v221
  %v255 = vunpack.c.l.b16 %v222
  %v256 = vpack.c.b16 %v244, %v243
  %v257 = vpack.c.b16 %v246, %v245
  %v258 = vpack.c.b16 %v248, %v247
  %v259 = vpack.c.b16 %v250, %v249
  %v260 = vpack.c.b16 %v252, %v251
  %v261 = vpack.c.b16 %v254, %v253
  %v262 = vpack.c.b16 %v255, %v255
  %vm269 = vcmask 818176
  %v271 = vsel %vm269, %v209, 0
  %vm273 = vcmask 1041408
  %v275 = vsel %vm273, %v262, 0
  %277 = vmatprep.subr.bf16.mxu0 0
  %278 = vmatpush1.bf16.msra.mxu0 %v256
  %279 = vmatprep.subr.bf16.mxu0 0
  %280 = vmatpush1.bf16.msra.mxu0 %v257
  %281 = vmatprep.subr.bf16.mxu0 0
  %282 = vmatpush1.bf16.msra.mxu0 %v258
  %283 = vmatprep.subr.bf16.mxu0 0
  %284 = vmatpush1.bf16.msra.mxu0 %v259
  %285 = vmatprep.subr.bf16.mxu0 0
  %286 = vmatpush1.bf16.msra.mxu0 %v260
  %287 = vmatprep.subr.bf16.mxu0 0
  %288 = vmatpush1.bf16.msra.mxu0 %v261
  %289 = vmatprep.subr.bf16.mxu0 0
  %290 = vmatpush1.bf16.msra.mxu0 %v275
  %291 = vmatprep.subr.bf16.mxu0 0
  %292 = vmatpush1.bf16.msra.mxu0 0
  %293 = vmatprep.subr.bf16.mxu0 0
  %294 = vmatpush1.bf16.msra.mxu0 0
  %295 = vmatprep.subr.bf16.mxu0 0
  %296 = vmatpush1.bf16.msra.mxu0 0
  %297 = vmatprep.subr.bf16.mxu0 0
  %298 = vmatpush1.bf16.msra.mxu0 0
  %299 = vmatprep.subr.bf16.mxu0 0
  %300 = vmatpush1.bf16.msra.mxu0 0
  %301 = vmatprep.subr.bf16.mxu0 0
  %302 = vmatpush1.bf16.msra.mxu0 0
  %303 = vmatprep.subr.bf16.mxu0 0
  %304 = vmatpush1.bf16.msra.mxu0 0
  %305 = vmatprep.subr.bf16.mxu0 0
  %306 = vmatpush1.bf16.msra.mxu0 0
  %307 = vmatprep.subr.bf16.mxu0 0
  %308 = vmatpush1.bf16.msra.mxu0 0
  %309 = vmatprep.mubr.bf16.mxu0 0
  %310 = vmatmul.mubr.bf16.gmra.mrb[0].mxu0 %v271
  %v311 = vpop.f32.mrb[0].mxu0
  %v312 = vadd.f32 %v228, %v311
  %v313 = vpop.f32.mrb[0].mxu0
  %v314 = vpop.f32.mrb[0].mxu0
  %v315 = vpop.f32.mrb[0].mxu0
  %316 = vdwg.mxu0
  %v317 = vmax.f32 %v312, 0.0
  %v318 = vpack.c.bf16 %v317, %v317
  %v319 = vld [vmem:[%s5] sm:$0xf]
  %v320 = vld [vmem:[%s5 + $0x4] sm:$0xf]
  %v321 = vld [vmem:[%s5 + $0x8] sm:$0xf]
  %v322 = vld [vmem:[%s5 + $0xc] sm:$0xf]
  %v323 = vld [vmem:[%s5 + $0x10] sm:$0xf]
  %v324 = vld [vmem:[%s5 + $0x14] sm:$0xf]
  %v325 = vld [vmem:[%s5 + $0x18] sm:$0x1]
  %v326 = vld [vmem:[%s6] sm:$0x1]
  %v328 = vlaneseq
  %v329 = vshrl.u32 %v328, 7
  %v330 = vsub.s32 0, %v329
  %v331 = vrot.slane %v326, %v330
  %v340 = vunpack.c.l.b16 %v319
  %v341 = vunpack.c.l.b16 %v320
  %v342 = vunpack.c.l.b16 %v321
  %v343 = vunpack.c.l.b16 %v322
  %v344 = vunpack.c.l.b16 %v323
  %v345 = vunpack.c.l.b16 %v324
  %v346 = vunpack.c.l.b16 %v325
  %v347 = vpack.c.b16 %v341, %v340
  %v348 = vpack.c.b16 %v343, %v342
  %v349 = vpack.c.b16 %v345, %v344
  %v350 = vpack.c.b16 %v346, %v346
  %vm354 = vcmask 408576
  %v356 = vsel %vm354, %v318, 0
  %vm358 = vcmask 1040384
  %v360 = vsel %vm358, %v350, 0
  %362 = vmatprep.subr.bf16.mxu0 0
  %363 = vmatpush1.bf16.msra.mxu0 %v347
  %364 = vmatprep.subr.bf16.mxu0 0
  %365 = vmatpush1.bf16.msra.mxu0 %v348
  %366 = vmatprep.subr.bf16.mxu0 0
  %367 = vmatpush1.bf16.msra.mxu0 %v349
  %368 = vmatprep.subr.bf16.mxu0 0
  %369 = vmatpush1.bf16.msra.mxu0 %v360
  %370 = vmatprep.subr.bf16.mxu0 0
  %371 = vmatpush1.bf16.msra.mxu0 0
  %372 = vmatprep.subr.bf16.mxu0 0
  %373 = vmatpush1.bf16.msra.mxu0 0
  %374 = vmatprep.subr.bf16.mxu0 0
  %375 = vmatpush1.bf16.msra.mxu0 0
  %376 = vmatprep.subr.bf16.mxu0 0
  %377 = vmatpush1.bf16.msra.mxu0 0
  %378 = vmatprep.subr.bf16.mxu0 0
  %379 = vmatpush1.bf16.msra.mxu0 0
  %380 = vmatprep.subr.bf16.mxu0 0
  %381 = vmatpush1.bf16.msra.mxu0 0
  %382 = vmatprep.subr.bf16.mxu0 0
  %383 = vmatpush1.bf16.msra.mxu0 0
  %384 = vmatprep.subr.bf16.mxu0 0
  %385 = vmatpush1.bf16.msra.mxu0 0
  %386 = vmatprep.subr.bf16.mxu0 0
  %387 = vmatpush1.bf16.msra.mxu0 0
  %388 = vmatprep.subr.bf16.mxu0 0
  %389 = vmatpush1.bf16.msra.mxu0 0
  %390 = vmatprep.subr.bf16.mxu0 0
  %391 = vmatpush1.bf16.msra.mxu0 0
  %392 = vmatprep.subr.bf16.mxu0 0
  %393 = vmatpush1.bf16.msra.mxu0 0
  %394 = vmatprep.mubr.bf16.mxu0 0
  %395 = vmatmul.mubr.bf16.gmra.mrb[0].mxu0 %v356
  %v396 = vpop.f32.mrb[0].mxu0
  %v397 = vadd.f32 %v331, %v396
  %v398 = vpop.f32.mrb[0].mxu0
  %v399 = vpop.f32.mrb[0].mxu0
  %v400 = vpop.f32.mrb[0].mxu0
  %401 = vdwg.mxu0
  %v402 = vmax.f32 %v397, 0.0
  %v403 = vpack.c.bf16 %v402, %v402
  %v404 = vld [vmem:[%s7] sm:$0xf]
  %v405 = vld [vmem:[%s7 + $0x4] sm:$0x1]
  %v406 = vld [vmem:[#allocation2] sm:$0x1]
  %v408 = vlaneseq
  %v409 = vshrl.u32 %v408, 7
  %v410 = vsub.s32 0, %v409
  %v411 = vrot.slane %v406, %v410
  %v415 = vunpack.c.l.b16 %v404
  %v416 = vunpack.c.l.b16 %v405
  %v417 = vpack.c.b16 %v416, %v415
  %vm418 = vcmask 80896
  %v420 = vsel %vm418, %v403, 0
  %v423 = vsel %vm162, %v417, 0
  %425 = vmatprep.subr.bf16.mxu0 0
  %426 = vmatpush1.bf16.msra.mxu0 %v423
  %427 = vmatprep.subr.bf16.mxu0 0
  %428 = vmatpush1.bf16.msra.mxu0 0
  %429 = vmatprep.subr.bf16.mxu0 0
  %430 = vmatpush1.bf16.msra.mxu0 0
  %431 = vmatprep.subr.bf16.mxu0 0
  %432 = vmatpush1.bf16.msra.mxu0 0
  %433 = vmatprep.subr.bf16.mxu0 0
  %434 = vmatpush1.bf16.msra.mxu0 0
  %435 = vmatprep.subr.bf16.mxu0 0
  %436 = vmatpush1.bf16.msra.mxu0 0
  %437 = vmatprep.subr.bf16.mxu0 0
  %438 = vmatpush1.bf16.msra.mxu0 0
  %439 = vmatprep.subr.bf16.mxu0 0
  %440 = vmatpush1.bf16.msra.mxu0 0
  %441 = vmatprep.subr.bf16.mxu0 0
  %442 = vmatpush1.bf16.msra.mxu0 0
  %443 = vmatprep.subr.bf16.mxu0 0
  %444 = vmatpush1.bf16.msra.mxu0 0
  %445 = vmatprep.subr.bf16.mxu0 0
  %446 = vmatpush1.bf16.msra.mxu0 0
  %447 = vmatprep.subr.bf16.mxu0 0
  %448 = vmatpush1.bf16.msra.mxu0 0
  %449 = vmatprep.subr.bf16.mxu0 0
  %450 = vmatpush1.bf16.msra.mxu0 0
  %451 = vmatprep.subr.bf16.mxu0 0
  %452 = vmatpush1.bf16.msra.mxu0 0
  %453 = vmatprep.subr.bf16.mxu0 0
  %454 = vmatpush1.bf16.msra.mxu0 0
  %455 = vmatprep.subr.bf16.mxu0 0
  %456 = vmatpush1.bf16.msra.mxu0 0
  %457 = vmatprep.mubr.bf16.mxu0 0
  %458 = vmatmul.mubr.bf16.gmra.mrb[0].mxu0 %v420
  %v459 = vpop.f32.mrb[0].mxu0
  %v460 = vadd.f32 %v411, %v459
  %v461 = vpop.f32.mrb[0].mxu0
  %v462 = vpop.f32.mrb[0].mxu0
  %v463 = vpop.f32.mrb[0].mxu0
  %464 = vdwg.mxu0
  %v465 = vxor.u32 %v460, 2147483648
  %v466 = vmul.f32 %v465, 1.442695
  %v467 = vpow.pop %v466
  %v468 = vadd.f32 %v467, 1.0
  %v469 = vrcp.pop %v468
  %v470 = vmul.f32 1.0, %v469
  %vm471 = vcmask 7168
  %472 = vst.msk [vmem:[%s9] sm:$0xff] %vm471, %v470
  // Predicated region
  $region38: #{tpu_custom_call.1} parent=0 // pred_check
    _
  $region39: #{tpu_custom_call.1} parent=0 // pred_check_branch
    %474 = sbr.rel (0) target = $region41
  $region40: #{tpu_custom_call.1} parent=0 // pred_region
    _
  $region41: #{tpu_custom_call.1} parent=0 // pred_fallthru
    _
  // Predicated region
  $region42: #{tpu_custom_call.1} parent=0 // pred_check
    _
  $region43: #{tpu_custom_call.1} parent=0 // pred_check_branch
    %476 = sbr.rel (0) target = $region45
  $region44: #{tpu_custom_call.1} parent=0 // pred_region
    _
  $region45: #{tpu_custom_call.1} parent=0 // pred_fallthru
    _

</llo_original>
